<compile_context>
chip_gen: v7x
topology: tpu7x:2x2x1
jax: 0.10.0
libtpu: 0.0.40
codegen_flags: <defaults>
</compile_context>

<pallas_src>
import functools

import jax
import jax.numpy as jnp
from jax.experimental import pallas as pl
from jax.experimental.pallas import tpu as pltpu


def _make_head_kernel(is_training: bool):
    """Kernel body specialized on the (static) training flag."""

    def kernel(f_ref, wi_ref, bi_ref, wu_ref, bu_ref, iw_ref, uw_ref):
        f = f_ref[...]                                                # [TB, F8]
        # intersection head: [TB, F8] @ [F8, K*C] + [1, K*C]
        li = jnp.dot(f, wi_ref[...], preferred_element_type=jnp.float32) + bi_ref[...]
        # union head: [TB, F8] @ [F8, C] + [1, C]
        lu = jnp.dot(f, wu_ref[...], preferred_element_type=jnp.float32) + bu_ref[...]
        if is_training:
            iw_ref[...] = jax.nn.sigmoid(li)
            uw_ref[...] = jax.nn.sigmoid(lu)
        else:
            iw_ref[...] = (li > 0.0).astype(jnp.float32)
            uw_ref[...] = (lu > 0.0).astype(jnp.float32)

    return kernel


def _choose_batch_tile(B: int) -> int:
    """Largest batch tile that keeps the VMEM footprint modest and obeys (8,128) rules."""
    if B <= 1024:
        return B                      # full-extent block is always legal
    for tb in (1024, 512, 256, 128, 64, 32, 16, 8):
        if B % tb == 0:
            return tb
    return B


def csg_stump_connection_head(feature, intersection_weight, intersection_bias,
                              union_weight, union_bias, is_training, *,
                              num_primitives, num_intersections):
    """Pallas implementation of CSGStumpConnectionHead.forward.

    Args (PyTorch conventions):
      feature              : [B, feature_dim * 8]
      intersection_weight  : [K * C, feature_dim * 8]   (nn.Linear weight, [out, in])
      intersection_bias    : [K * C]
      union_weight         : [C, feature_dim * 8]
      union_bias           : [C]
      is_training          : static Python bool
    Returns:
      (intersection_layer_weights [B, K, C], union_layer_weights [B, C])
    """
    B, F8 = feature.shape
    K, C = num_primitives, num_intersections
    KC = K * C

    f = feature.astype(jnp.float32)
    wi = jnp.transpose(intersection_weight.astype(jnp.float32))      # [F8, K*C]
    wu = jnp.transpose(union_weight.astype(jnp.float32))             # [F8, C]
    bi = intersection_bias.astype(jnp.float32).reshape(1, KC)
    bu = union_bias.astype(jnp.float32).reshape(1, C)

    TB = _choose_batch_tile(B)
    grid = (B // TB,)

    kernel = _make_head_kernel(bool(is_training))

    iw_flat, uw = pl.pallas_call(
        kernel,
        out_shape=(jax.ShapeDtypeStruct((B, KC), jnp.float32),
                   jax.ShapeDtypeStruct((B, C), jnp.float32)),
        grid=grid,
        in_specs=[
            pl.BlockSpec((TB, F8), lambda i: (i, 0)),   # feature tile
            pl.BlockSpec((F8, KC), lambda i: (0, 0)),   # intersection weight (resident)
            pl.BlockSpec((1, KC), lambda i: (0, 0)),    # intersection bias
            pl.BlockSpec((F8, C), lambda i: (0, 0)),    # union weight (resident)
            pl.BlockSpec((1, C), lambda i: (0, 0)),     # union bias
        ],
        out_specs=(
            pl.BlockSpec((TB, KC), lambda i: (i, 0)),
            pl.BlockSpec((TB, C), lambda i: (i, 0)),
        ),
        compiler_params=pltpu.CompilerParams(dimension_semantics=("parallel",)),
    )(f, wi, bi, wu, bu)

    intersection_layer_weights = iw_flat.reshape(B, K, C)   # matches torch .view(-1, K, C)
    union_layer_weights = uw                                 # [B, C]
    return intersection_layer_weights, union_layer_weights


if __name__ == "__main__":
    # Small shapes consistent with the module.
    B = 2
    feature_dim = 32
    F8 = feature_dim * 8          # the module consumes feature_dim * 8 features
    num_primitives = 8            # K
    num_intersections = 4         # C

    key = jax.random.PRNGKey(0)
    kf, kwi, kbi, kwu, kbu = jax.random.split(key, 5)
    feature = jax.random.normal(kf, (B, F8), dtype=jnp.float32)
    # nn.Linear stores weights as [out_features, in_features]; emulate that layout.
    intersection_weight = 0.1 * jax.random.normal(kwi, (num_primitives * num_intersections, F8),
                                                  dtype=jnp.float32)
    intersection_bias = 0.1 * jax.random.normal(kbi, (num_primitives * num_intersections,),
                                                dtype=jnp.float32)
    union_weight = 0.1 * jax.random.normal(kwu, (num_intersections, F8), dtype=jnp.float32)
    union_bias = 0.1 * jax.random.normal(kbu, (num_intersections,), dtype=jnp.float32)

    head = functools.partial(csg_stump_connection_head,
                             num_primitives=num_primitives,
                             num_intersections=num_intersections)

    # Training path (sigmoid) and eval path (hard threshold).
    iw_t, uw_t = head(feature, intersection_weight, intersection_bias,
                      union_weight, union_bias, is_training=True)
    iw_e, uw_e = head(feature, intersection_weight, intersection_bias,
                      union_weight, union_bias, is_training=False)
    jax.block_until_ready((iw_t, uw_t, iw_e, uw_e))

    # Pure-JAX reference for correctness.
    li = feature @ intersection_weight.T + intersection_bias
    lu = feature @ union_weight.T + union_bias
    ref_iw_t = jax.nn.sigmoid(li).reshape(B, num_primitives, num_intersections)
    ref_uw_t = jax.nn.sigmoid(lu)
    ref_iw_e = (li > 0).astype(jnp.float32).reshape(B, num_primitives, num_intersections)
    ref_uw_e = (lu > 0).astype(jnp.float32)

    assert iw_t.shape == (B, num_primitives, num_intersections)
    assert uw_t.shape == (B, num_intersections)
    assert iw_e.shape == (B, num_primitives, num_intersections)
    assert uw_e.shape == (B, num_intersections)
    assert jnp.allclose(iw_t, ref_iw_t, atol=1e-5, rtol=1e-5)
    assert jnp.allclose(uw_t, ref_uw_t, atol=1e-5, rtol=1e-5)
    assert jnp.allclose(iw_e, ref_iw_e)
    assert jnp.allclose(uw_e, ref_uw_e)

    print("KERNEL_OK")
</pallas_src>

<mosaic_0001>
module attributes {stable_mosaic.version = 11 : i64} {
  func.func @kernel(%arg0: i32, %arg1: memref<2x256xf32, #tpu.memory_space<vmem>>, %arg2: memref<256x32xf32, #tpu.memory_space<vmem>>, %arg3: memref<1x32xf32, #tpu.memory_space<vmem>>, %arg4: memref<256x4xf32, #tpu.memory_space<vmem>>, %arg5: memref<1x4xf32, #tpu.memory_space<vmem>>, %arg6: memref<2x32xf32, #tpu.memory_space<vmem>>, %arg7: memref<2x4xf32, #tpu.memory_space<vmem>>) attributes {dimension_semantics = [#tpu.dimension_semantics<parallel>], iteration_bounds = array<i64: 1>, scalar_prefetch = 0 : i64, scratch_operands = 0 : i64, tpu.core_type = #tpu.core_type<tc>, window_params = [{transform_indices = @transform_0, window_bounds = array<i64: 2, 256>}, {pipeline_mode = #tpu.pipeline_mode<synchronous>, transform_indices = @transform_1, window_bounds = array<i64: 256, 32>}, {pipeline_mode = #tpu.pipeline_mode<synchronous>, transform_indices = @transform_2, window_bounds = array<i64: 1, 32>}, {pipeline_mode = #tpu.pipeline_mode<synchronous>, transform_indices = @transform_3, window_bounds = array<i64: 256, 4>}, {pipeline_mode = #tpu.pipeline_mode<synchronous>, transform_indices = @transform_4, window_bounds = array<i64: 1, 4>}, {transform_indices = @transform_5, window_bounds = array<i64: 2, 32>}, {transform_indices = @transform_6, window_bounds = array<i64: 2, 4>}]} {
    %c0 = arith.constant 0 : index
    %c0_0 = arith.constant 0 : index
    %0 = vector.load %arg1[%c0, %c0_0] : memref<2x256xf32, #tpu.memory_space<vmem>>, vector<2x256xf32>
    %c0_1 = arith.constant 0 : index
    %c0_2 = arith.constant 0 : index
    %1 = vector.load %arg2[%c0_1, %c0_2] : memref<256x32xf32, #tpu.memory_space<vmem>>, vector<256x32xf32>
    %cst = arith.constant dense<0.000000e+00> : vector<2x32xf32>
    %2 = tpu.matmul %0, %1, %cst {dimension_numbers = #tpu.dot_dimension_numbers<[1], [0], [0], [1], [0, 0, 1, 1], [], []>} : vector<2x256xf32>, vector<256x32xf32>, vector<2x32xf32> -> vector<2x32xf32>
    %c0_3 = arith.constant 0 : index
    %c0_4 = arith.constant 0 : index
    %3 = vector.load %arg3[%c0_3, %c0_4] : memref<1x32xf32, #tpu.memory_space<vmem>>, vector<1x32xf32>
    %4 = vector.broadcast %3 : vector<1x32xf32> to vector<2x32xf32>
    %5 = arith.addf %2, %4 : vector<2x32xf32>
    %c0_5 = arith.constant 0 : index
    %c0_6 = arith.constant 0 : index
    %6 = vector.load %arg4[%c0_5, %c0_6] : memref<256x4xf32, #tpu.memory_space<vmem>>, vector<256x4xf32>
    %cst_7 = arith.constant dense<0.000000e+00> : vector<2x4xf32>
    %7 = tpu.matmul %0, %6, %cst_7 {dimension_numbers = #tpu.dot_dimension_numbers<[1], [0], [0], [1], [0, 0, 1, 1], [], []>} : vector<2x256xf32>, vector<256x4xf32>, vector<2x4xf32> -> vector<2x4xf32>
    %c0_8 = arith.constant 0 : index
    %c0_9 = arith.constant 0 : index
    %8 = vector.load %arg5[%c0_8, %c0_9] : memref<1x4xf32, #tpu.memory_space<vmem>>, vector<1x4xf32>
    %9 = vector.broadcast %8 : vector<1x4xf32> to vector<2x4xf32>
    %10 = arith.addf %7, %9 : vector<2x4xf32>
    %11 = arith.negf %5 : vector<2x32xf32>
    %12 = math.exp %11 : vector<2x32xf32>
    %cst_10 = arith.constant 1.000000e+00 : f32
    %13 = vector.broadcast %cst_10 : f32 to vector<2x32xf32>
    %14 = arith.addf %13, %12 : vector<2x32xf32>
    %15 = arith.divf %13, %14 : vector<2x32xf32>
    %c0_11 = arith.constant 0 : index
    %c0_12 = arith.constant 0 : index
    %16 = vector.load %arg6[%c0_11, %c0_12] : memref<2x32xf32, #tpu.memory_space<vmem>>, vector<2x32xf32>
    tpu.vector_store %arg6[%c0_11, %c0_12], %15 {strides = array<i32>} : memref<2x32xf32, #tpu.memory_space<vmem>>, vector<2x32xf32>,
    %17 = arith.negf %10 : vector<2x4xf32>
    %18 = math.exp %17 : vector<2x4xf32>
    %cst_13 = arith.constant 1.000000e+00 : f32
    %19 = vector.broadcast %cst_13 : f32 to vector<2x4xf32>
    %20 = arith.addf %19, %18 : vector<2x4xf32>
    %21 = arith.divf %19, %20 : vector<2x4xf32>
    %c0_14 = arith.constant 0 : index
    %c0_15 = arith.constant 0 : index
    %22 = vector.load %arg7[%c0_14, %c0_15] : memref<2x4xf32, #tpu.memory_space<vmem>>, vector<2x4xf32>
    tpu.vector_store %arg7[%c0_14, %c0_15], %21 {strides = array<i32>} : memref<2x4xf32, #tpu.memory_space<vmem>>, vector<2x4xf32>,
    return
  }
  func.func @transform_0(%arg0: i32) -> (i32, i32) {
    %c0_i32 = arith.constant 0 : i32
    %c0_i32_0 = arith.constant 0 : i32
    return %arg0, %c0_i32 : i32, i32
  }
  func.func @transform_1(%arg0: i32) -> (i32, i32) {
    %c0_i32 = arith.constant 0 : i32
    %c0_i32_0 = arith.constant 0 : i32
    %c0_i32_1 = arith.constant 0 : i32
    return %c0_i32, %c0_i32_0 : i32, i32
  }
  func.func @transform_2(%arg0: i32) -> (i32, i32) {
    %c0_i32 = arith.constant 0 : i32
    %c0_i32_0 = arith.constant 0 : i32
    %c0_i32_1 = arith.constant 0 : i32
    return %c0_i32, %c0_i32_0 : i32, i32
  }
  func.func @transform_3(%arg0: i32) -> (i32, i32) {
    %c0_i32 = arith.constant 0 : i32
    %c0_i32_0 = arith.constant 0 : i32
    %c0_i32_1 = arith.constant 0 : i32
    return %c0_i32, %c0_i32_0 : i32, i32
  }
  func.func @transform_4(%arg0: i32) -> (i32, i32) {
    %c0_i32 = arith.constant 0 : i32
    %c0_i32_0 = arith.constant 0 : i32
    %c0_i32_1 = arith.constant 0 : i32
    return %c0_i32, %c0_i32_0 : i32, i32
  }
  func.func @transform_5(%arg0: i32) -> (i32, i32) {
    %c0_i32 = arith.constant 0 : i32
    %c0_i32_0 = arith.constant 0 : i32
    return %arg0, %c0_i32 : i32, i32
  }
  func.func @transform_6(%arg0: i32) -> (i32, i32) {
    %c0_i32 = arith.constant 0 : i32
    %c0_i32_0 = arith.constant 0 : i32
    return %arg0, %c0_i32 : i32, i32
  }
}

</mosaic_0001>

<llo_original>
// kernel: tpu_custom_call.1
$region0: #{tpu_custom_call.1}
  #allocation0 [shape = 'u32[]', space=smem, size = 0x4, offset = 0x4, fixed_abs, tag = 'smem constant byte address 0x4 - core index']
  #allocation1 [shape = 'u32[144,128]{1,0:T(1,128)}', space=vmem, size = 0x12000, scoped, tag = 'internal scratch']
  %s0 = inlined_call_operand.vmem [shape: f32[2,256], index: 0, kind: input, shape index: {}]
  %s1 = inlined_call_operand.vmem [shape: f32[256,32], index: 1, kind: input, shape index: {}]
  %s2 = inlined_call_operand.vmem [shape: f32[1,32], index: 2, kind: input, shape index: {}]
  %s3 = inlined_call_operand.vmem [shape: f32[256,4], index: 3, kind: input, shape index: {}]
  %s4 = inlined_call_operand.vmem [shape: f32[1,4], index: 4, kind: input, shape index: {}]
  %s5 = inlined_call_operand.hbm [shape: f32[2,32], index: 5, kind: output, shape index: {0}]
  %s6 = inlined_call_operand.hbm [shape: f32[2,4], index: 6, kind: output, shape index: {1}]
  %7 = xla_tuple %s5, %s6
  %s8 = sld [smem:[#allocation0]]
  $region38: #{tpu_custom_call.1} parent=0
    _
  %s10 = ssub.s32 1, %s8
  %s11 = scalar_select 0, %s10, %s8
  $region1: #{tpu_custom_call.1} parent=0
    #allocation2 [shape = 'u8[1024]{0}', space=vmem, size = 0x400, scoped, tag = 'output window, operand 0, single buffered']
    #allocation3 [shape = 's32[1]{0}', space=sflag, size = 0x4, scoped, tag = 'scoped memory for tpu_custom_call.1']
    #allocation4 [shape = 'u8[1024]{0}', space=vmem, size = 0x400, scoped, tag = 'output window, operand 1, single buffered']
    #allocation5 [shape = 's32[1]{0}', space=sflag, size = 0x4, scoped, tag = 'scoped memory for tpu_custom_call.1']
    %12 = vsyncpa [#allocation3], 0
    %13 = vsyncpa [#allocation5], 0
    // Predicated region
    $region2: #{tpu_custom_call.1} parent=1 // pred_check
      _
    $region3: #{tpu_custom_call.1} parent=1 // pred_check_branch
      %15 = sbr.rel (0) target = $region5
    $region4: #{tpu_custom_call.1} parent=1 // pred_region
      _
    $region5: #{tpu_custom_call.1} parent=1 // pred_fallthru
      _
    // Predicated region
    $region6: #{tpu_custom_call.1} parent=1 // pred_check
      _
    $region7: #{tpu_custom_call.1} parent=1 // pred_check_branch
      %17 = sbr.rel (0) target = $region9
    $region8: #{tpu_custom_call.1} parent=1 // pred_region
      _
    $region9: #{tpu_custom_call.1} parent=1 // pred_fallthru
      _
    // Predicated region
    $region10: #{tpu_custom_call.1} parent=1 // pred_check
      _
    $region11: #{tpu_custom_call.1} parent=1 // pred_check_branch
      %19 = sbr.rel (0) target = $region13
    $region12: #{tpu_custom_call.1} parent=1 // pred_region
      _
    $region13: #{tpu_custom_call.1} parent=1 // pred_fallthru
      _
    // Predicated region
    $region14: #{tpu_custom_call.1} parent=1 // pred_check
      _
    $region15: #{tpu_custom_call.1} parent=1 // pred_check_branch
      %21 = sbr.rel (0) target = $region17
    $region16: #{tpu_custom_call.1} parent=1 // pred_region
      _
    $region17: #{tpu_custom_call.1} parent=1 // pred_fallthru
      _
    // Predicated region
    $region18: #{tpu_custom_call.1} parent=1 // pred_check
      _
    $region19: #{tpu_custom_call.1} parent=1 // pred_check_branch
      %23 = sbr.rel (0) target = $region21
    $region20: #{tpu_custom_call.1} parent=1 // pred_region
      _
    $region21: #{tpu_custom_call.1} parent=1 // pred_fallthru
      _
    %v24 = vld [vmem:[%s0] sm:$0xf]
    %v25 = vld [vmem:[%s1] sm:$0xff]
    %v26 = vld [vmem:[%s1 + $0x8] sm:$0xff]
    %v27 = vld [vmem:[%s1 + $0x10] sm:$0xff]
    %v28 = vld [vmem:[%s1 + $0x18] sm:$0xff]
    %v29 = vld [vmem:[%s1 + $0x20] sm:$0xff]
    %v30 = vld [vmem:[%s1 + $0x28] sm:$0xff]
    %v31 = vld [vmem:[%s1 + $0x30] sm:$0xff]
    %v32 = vld [vmem:[%s1 + $0x38] sm:$0xff]
    %v33 = vld [vmem:[%s1 + $0x40] sm:$0xff]
    %v34 = vld [vmem:[%s1 + $0x48] sm:$0xff]
    %v35 = vld [vmem:[%s1 + $0x50] sm:$0xff]
    %v36 = vld [vmem:[%s1 + $0x58] sm:$0xff]
    %v37 = vld [vmem:[%s1 + $0x60] sm:$0xff]
    %v38 = vld [vmem:[%s1 + $0x68] sm:$0xff]
    %v39 = vld [vmem:[%s1 + $0x70] sm:$0xff]
    %v40 = vld [vmem:[%s1 + $0x78] sm:$0xff]
    %v41 = vld [vmem:[%s1 + $0x80] sm:$0xff]
    %v42 = vld [vmem:[%s1 + $0x88] sm:$0xff]
    %v43 = vld [vmem:[%s1 + $0x90] sm:$0xff]
    %v44 = vld [vmem:[%s1 + $0x98] sm:$0xff]
    %v45 = vld [vmem:[%s1 + $0xa0] sm:$0xff]
    %v46 = vld [vmem:[%s1 + $0xa8] sm:$0xff]
    %v47 = vld [vmem:[%s1 + $0xb0] sm:$0xff]
    %v48 = vld [vmem:[%s1 + $0xb8] sm:$0xff]
    %v49 = vld [vmem:[%s1 + $0xc0] sm:$0xff]
    %v50 = vld [vmem:[%s1 + $0xc8] sm:$0xff]
    %v51 = vld [vmem:[%s1 + $0xd0] sm:$0xff]
    %v52 = vld [vmem:[%s1 + $0xd8] sm:$0xff]
    %v53 = vld [vmem:[%s1 + $0xe0] sm:$0xff]
    %v54 = vld [vmem:[%s1 + $0xe8] sm:$0xff]
    %v55 = vld [vmem:[%s1 + $0xf0] sm:$0xff]
    %v56 = vld [vmem:[%s1 + $0xf8] sm:$0xff]
    %v57 = vld [vmem:[%s2] sm:$0x1]
    %v59 = vlaneseq
    %v60 = vshrl.u32 %v59, 7
    %v61 = vsub.s32 0, %v60
    %v62 = vrot.slane %v57, %v61
    %v66 = vunpack.c.l.s4 1983009808
    %v67 = vunpack.c.0.s8 %v66
    %v68 = vlaneseq
    %v69 = vshrl.u32 %v68, 7
    %v70 = vsub.s32 %v67, %v69
    %v71 = vrot.slane %v24, %v70
    %v72 = vcombine.high %v71, %v71
    %75 = vmatprep.subr.mxu0 0.0
    %76 = vmatpush1.msra.mxu0 %v25
    %77 = vmatprep.subr.mxu0 0.0
    %78 = vmatpush1.msra.mxu0 %v26
    %79 = vmatprep.subr.mxu0 0.0
    %80 = vmatpush1.msra.mxu0 %v27
    %81 = vmatprep.subr.mxu0 0.0
    %82 = vmatpush1.msra.mxu0 %v28
    %83 = vmatprep.subr.mxu0 0.0
    %84 = vmatpush1.msra.mxu0 %v29
    %85 = vmatprep.subr.mxu0 0.0
    %86 = vmatpush1.msra.mxu0 %v30
    %87 = vmatprep.subr.mxu0 0.0
    %88 = vmatpush1.msra.mxu0 %v31
    %89 = vmatprep.subr.mxu0 0.0
    %90 = vmatpush1.msra.mxu0 %v32
    %91 = vmatprep.subr.mxu0 0.0
    %92 = vmatpush1.msra.mxu0 %v33
    %93 = vmatprep.subr.mxu0 0.0
    %94 = vmatpush1.msra.mxu0 %v34
    %95 = vmatprep.subr.mxu0 0.0
    %96 = vmatpush1.msra.mxu0 %v35
    %97 = vmatprep.subr.mxu0 0.0
    %98 = vmatpush1.msra.mxu0 %v36
    %99 = vmatprep.subr.mxu0 0.0
    %100 = vmatpush1.msra.mxu0 %v37
    %101 = vmatprep.subr.mxu0 0.0
    %102 = vmatpush1.msra.mxu0 %v38
    %103 = vmatprep.subr.mxu0 0.0
    %104 = vmatpush1.msra.mxu0 %v39
    %105 = vmatprep.subr.mxu0 0.0
    %106 = vmatpush1.msra.mxu0 %v40
    %107 = vmatprep.subr.mxu0 0.0
    %108 = vmatpush1.msra.mxu0 %v41
    %109 = vmatprep.subr.mxu0 0.0
    %110 = vmatpush1.msra.mxu0 %v42
    %111 = vmatprep.subr.mxu0 0.0
    %112 = vmatpush1.msra.mxu0 %v43
    %113 = vmatprep.subr.mxu0 0.0
    %114 = vmatpush1.msra.mxu0 %v44
    %115 = vmatprep.subr.mxu0 0.0
    %116 = vmatpush1.msra.mxu0 %v45
    %117 = vmatprep.subr.mxu0 0.0
    %118 = vmatpush1.msra.mxu0 %v46
    %119 = vmatprep.subr.mxu0 0.0
    %120 = vmatpush1.msra.mxu0 %v47
    %121 = vmatprep.subr.mxu0 0.0
    %122 = vmatpush1.msra.mxu0 %v48
    %123 = vmatprep.subr.mxu0 0.0
    %124 = vmatpush1.msra.mxu0 %v49
    %125 = vmatprep.subr.mxu0 0.0
    %126 = vmatpush1.msra.mxu0 %v50
    %127 = vmatprep.subr.mxu0 0.0
    %128 = vmatpush1.msra.mxu0 %v51
    %129 = vmatprep.subr.mxu0 0.0
    %130 = vmatpush1.msra.mxu0 %v52
    %131 = vmatprep.subr.mxu0 0.0
    %132 = vmatpush1.msra.mxu0 %v53
    %133 = vmatprep.subr.mxu0 0.0
    %134 = vmatpush1.msra.mxu0 %v54
    %135 = vmatprep.subr.mxu0 0.0
    %136 = vmatpush1.msra.mxu0 %v55
    %137 = vmatprep.subr.mxu0 0.0
    %138 = vmatpush1.msra.mxu0 %v56
    %139 = vmatprep.mubr.f32.mxu0 %v72
    %140 = vmatmul.mubr.f32.gmra.mrb[0].mxu0 %v71
    %v141 = vpop.f32.mrb[0].mxu0
    %v142 = vadd.f32 %v62, %v141
    %v143 = vpop.f32.mrb[0].mxu0
    %144 = vdwg.mxu0
    %v145 = vld [vmem:[%s3] sm:$0xff]
    %v146 = vld [vmem:[%s3 + $0x8] sm:$0xff]
    %v147 = vld [vmem:[%s3 + $0x10] sm:$0xff]
    %v148 = vld [vmem:[%s3 + $0x18] sm:$0xff]
    %v149 = vld [vmem:[%s3 + $0x20] sm:$0xff]
    %v150 = vld [vmem:[%s3 + $0x28] sm:$0xff]
    %v151 = vld [vmem:[%s3 + $0x30] sm:$0xff]
    %v152 = vld [vmem:[%s3 + $0x38] sm:$0xff]
    %v153 = vld [vmem:[%s3 + $0x40] sm:$0xff]
    %v154 = vld [vmem:[%s3 + $0x48] sm:$0xff]
    %v155 = vld [vmem:[%s3 + $0x50] sm:$0xff]
    %v156 = vld [vmem:[%s3 + $0x58] sm:$0xff]
    %v157 = vld [vmem:[%s3 + $0x60] sm:$0xff]
    %v158 = vld [vmem:[%s3 + $0x68] sm:$0xff]
    %v159 = vld [vmem:[%s3 + $0x70] sm:$0xff]
    %v160 = vld [vmem:[%s3 + $0x78] sm:$0xff]
    %v161 = vld [vmem:[%s3 + $0x80] sm:$0xff]
    %v162 = vld [vmem:[%s3 + $0x88] sm:$0xff]
    %v163 = vld [vmem:[%s3 + $0x90] sm:$0xff]
    %v164 = vld [vmem:[%s3 + $0x98] sm:$0xff]
    %v165 = vld [vmem:[%s3 + $0xa0] sm:$0xff]
    %v166 = vld [vmem:[%s3 + $0xa8] sm:$0xff]
    %v167 = vld [vmem:[%s3 + $0xb0] sm:$0xff]
    %v168 = vld [vmem:[%s3 + $0xb8] sm:$0xff]
    %v169 = vld [vmem:[%s3 + $0xc0] sm:$0xff]
    %v170 = vld [vmem:[%s3 + $0xc8] sm:$0xff]
    %v171 = vld [vmem:[%s3 + $0xd0] sm:$0xff]
    %v172 = vld [vmem:[%s3 + $0xd8] sm:$0xff]
    %v173 = vld [vmem:[%s3 + $0xe0] sm:$0xff]
    %v174 = vld [vmem:[%s3 + $0xe8] sm:$0xff]
    %v175 = vld [vmem:[%s3 + $0xf0] sm:$0xff]
    %v176 = vld [vmem:[%s3 + $0xf8] sm:$0xff]
    %v177 = vld [vmem:[%s4] sm:$0x1]
    %v179 = vlaneseq
    %v180 = vshrl.u32 %v179, 7
    %v181 = vsub.s32 0, %v180
    %v182 = vrot.slane %v177, %v181
    %184 = vmatprep.subr.mxu0 0.0
    %185 = vmatpush1.msra.mxu0 %v145
    %186 = vmatprep.subr.mxu0 0.0
    %187 = vmatpush1.msra.mxu0 %v146
    %188 = vmatprep.subr.mxu0 0.0
    %189 = vmatpush1.msra.mxu0 %v147
    %190 = vmatprep.subr.mxu0 0.0
    %191 = vmatpush1.msra.mxu0 %v148
    %192 = vmatprep.subr.mxu0 0.0
    %193 = vmatpush1.msra.mxu0 %v149
    %194 = vmatprep.subr.mxu0 0.0
    %195 = vmatpush1.msra.mxu0 %v150
    %196 = vmatprep.subr.mxu0 0.0
    %197 = vmatpush1.msra.mxu0 %v151
    %198 = vmatprep.subr.mxu0 0.0
    %199 = vmatpush1.msra.mxu0 %v152
    %200 = vmatprep.subr.mxu0 0.0
    %201 = vmatpush1.msra.mxu0 %v153
    %202 = vmatprep.subr.mxu0 0.0
    %203 = vmatpush1.msra.mxu0 %v154
    %204 = vmatprep.subr.mxu0 0.0
    %205 = vmatpush1.msra.mxu0 %v155
    %206 = vmatprep.subr.mxu0 0.0
    %207 = vmatpush1.msra.mxu0 %v156
    %208 = vmatprep.subr.mxu0 0.0
    %209 = vmatpush1.msra.mxu0 %v157
    %210 = vmatprep.subr.mxu0 0.0
    %211 = vmatpush1.msra.mxu0 %v158
    %212 = vmatprep.subr.mxu0 0.0
    %213 = vmatpush1.msra.mxu0 %v159
    %214 = vmatprep.subr.mxu0 0.0
    %215 = vmatpush1.msra.mxu0 %v160
    %216 = vmatprep.subr.mxu0 0.0
    %217 = vmatpush1.msra.mxu0 %v161
    %218 = vmatprep.subr.mxu0 0.0
    %219 = vmatpush1.msra.mxu0 %v162
    %220 = vmatprep.subr.mxu0 0.0
    %221 = vmatpush1.msra.mxu0 %v163
    %222 = vmatprep.subr.mxu0 0.0
    %223 = vmatpush1.msra.mxu0 %v164
    %224 = vmatprep.subr.mxu0 0.0
    %225 = vmatpush1.msra.mxu0 %v165
    %226 = vmatprep.subr.mxu0 0.0
    %227 = vmatpush1.msra.mxu0 %v166
    %228 = vmatprep.subr.mxu0 0.0
    %229 = vmatpush1.msra.mxu0 %v167
    %230 = vmatprep.subr.mxu0 0.0
    %231 = vmatpush1.msra.mxu0 %v168
    %232 = vmatprep.subr.mxu0 0.0
    %233 = vmatpush1.msra.mxu0 %v169
    %234 = vmatprep.subr.mxu0 0.0
    %235 = vmatpush1.msra.mxu0 %v170
    %236 = vmatprep.subr.mxu0 0.0
    %237 = vmatpush1.msra.mxu0 %v171
    %238 = vmatprep.subr.mxu0 0.0
    %239 = vmatpush1.msra.mxu0 %v172
    %240 = vmatprep.subr.mxu0 0.0
    %241 = vmatpush1.msra.mxu0 %v173
    %242 = vmatprep.subr.mxu0 0.0
    %243 = vmatpush1.msra.mxu0 %v174
    %244 = vmatprep.subr.mxu0 0.0
    %245 = vmatpush1.msra.mxu0 %v175
    %246 = vmatprep.subr.mxu0 0.0
    %247 = vmatpush1.msra.mxu0 %v176
    %248 = vmatprep.mubr.f32.mxu0 %v72
    %249 = vmatmul.mubr.f32.gmra.mrb[0].mxu0 %v71
    %v250 = vpop.f32.mrb[0].mxu0
    %v251 = vadd.f32 %v182, %v250
    %v252 = vpop.f32.mrb[0].mxu0
    %253 = vdwg.mxu0
    %v254 = vxor.u32 %v142, 2147483648
    %v255 = vmul.f32 %v254, 1.442695
    %v256 = vpow.pop %v255
    %v257 = vadd.f32 %v256, 1.0
    %v258 = vrcp.pop %v257
    %v259 = vmul.f32 1.0, %v258
    %vm260 = vcmask 254976
    %261 = vst.msk [vmem:[#allocation2] sm:$0x3] %vm260, %v259
    %v262 = vxor.u32 %v251, 2147483648
    %v263 = vmul.f32 %v262, 1.442695
    %v264 = vpow.pop %v263
    %v265 = vadd.f32 %v264, 1.0
    %v266 = vrcp.pop %v265
    %v267 = vmul.f32 1.0, %v266
    %vm268 = vcmask 25600
    %269 = vst.msk [vmem:[#allocation4] sm:$0x3] %vm268, %v267
    // Predicated region
    $region22: #{tpu_custom_call.1} parent=1 // pred_check
      _
    $region23: #{tpu_custom_call.1} parent=1 // pred_check_branch
      %271 = sbr.rel (0) target = $region25
    $region24: #{tpu_custom_call.1} parent=1 // pred_region
      %s273 = ssub.s32 32, 32
      %274 = vsyncadd [#allocation3], %s273
      %s276 = sshll.u32 [#allocation2], 4
      %s277 = int_to_ptr.vmem [resolvable:$true] %s276
      %279 = dma.vmem_to_hbm [thread:$0]  %s277, 32, %s5, [#allocation3]
    $region25: #{tpu_custom_call.1} parent=1 // pred_fallthru
      _
    // Predicated region
    $region26: #{tpu_custom_call.1} parent=1 // pred_check
      _
    $region27: #{tpu_custom_call.1} parent=1 // pred_check_branch
      %281 = sbr.rel (0) target = $region29
    $region28: #{tpu_custom_call.1} parent=1 // pred_region
      %s283 = ssub.s32 32, 32
      %284 = vsyncadd [#allocation5], %s283
      %s286 = sshll.u32 [#allocation4], 4
      %s287 = int_to_ptr.vmem [resolvable:$true] %s286
      %289 = dma.vmem_to_hbm [thread:$0]  %s287, 32, %s6, [#allocation5]
    $region29: #{tpu_custom_call.1} parent=1 // pred_fallthru
      _
    // Predicated region
    $region30: #{tpu_custom_call.1} parent=1 // pred_check
      _
    $region31: #{tpu_custom_call.1} parent=1 // pred_check_branch
      %291 = sbr.rel (0) target = $region33
    $region32: #{tpu_custom_call.1} parent=1 // pred_region
      %292 = dma.done [#allocation3], 32
    $region33: #{tpu_custom_call.1} parent=1 // pred_fallthru
      _
    // Predicated region
    $region34: #{tpu_custom_call.1} parent=1 // pred_check
      _
    $region35: #{tpu_custom_call.1} parent=1 // pred_check_branch
      %294 = sbr.rel (0) target = $region37
    $region36: #{tpu_custom_call.1} parent=1 // pred_region
      %295 = dma.done [#allocation5], 32
    $region37: #{tpu_custom_call.1} parent=1 // pred_fallthru
      _
    %296 = vsyncpa [#allocation3], 1
    %297 = vsyncpa [#allocation5], 1

</llo_original>
